<compile_context>
chip_gen: v7x
topology: tpu7x:2x2x1
jax: 0.10.0
libtpu: 0.0.40
codegen_flags: <defaults>
</compile_context>

<pallas_src>
import functools

import jax
import jax.numpy as jnp
from jax import lax
from jax.experimental import pallas as pl
from jax.experimental.pallas import tpu as pltpu


LABEL_SIZE = 6
TARGET_SIZE = 4
MATRIX_SIZE = 2
PACKED_ROWS = LABEL_SIZE + MATRIX_SIZE   # 8 rows -> exactly one sublane tile
EPS = 1e-8                               # matches module eps / PoissonNLLLoss eps
MAX_TILE_N = 256 * 1024                  # keeps VMEM use < ~25 MiB (v7x-safe)


def _round_up(x, m):
    return ((x + m - 1) // m) * m


def _zip_loss_kernel(params_ref, data_ref, out_ref, acc_ref, *,
                     tile_n, n_valid, needs_mask, inv_target, inv_matrix, eps):
    i = pl.program_id(0)

    @pl.when(i == 0)
    def _init():
        acc_ref[...] = jnp.zeros_like(acc_ref)

    total_count = params_ref[0]
    p_t = params_ref[1]        # sigmoid(target_inflat_prob)  (precomputed scalar)
    p_m = params_ref[2]        # sigmoid(matrix_inflat_prob)
    log1m_pt = params_ref[3]   # log(1 - p_t + eps)
    log1m_pm = params_ref[4]   # log(1 - p_m + eps)

    data = data_ref[...]                               # (8, TILE) f32
    yp_t = data[LABEL_SIZE:LABEL_SIZE + 1, :]          # (1, TILE) target logit
    yp_m = data[LABEL_SIZE + 1:PACKED_ROWS, :]         # (1, TILE) matrix logit

    # All transcendentals on per-sample (1, TILE) vectors (EUP), 8 per sample.
    lam_t = total_count * jnp.exp(yp_m + yp_t)                        # (1, TILE)
    lam_m = total_count * jnp.exp(yp_m)                               # (1, TILE)
    zero_t = -jnp.log(p_t + (1.0 - p_t) * jnp.exp(-lam_t) + eps)      # (1, TILE)
    zero_m = -jnp.log(p_m + (1.0 - p_m) * jnp.exp(-lam_m) + eps)      # (1, TILE)
    loglam_t = jnp.log(lam_t + eps)                                   # (1, TILE)
    loglam_m = jnp.log(lam_m + eps)                                   # (1, TILE)

    # Broadcast per-head vectors row-wise into one dense (8, TILE) slab:
    # rows 0..3 -> target head, rows 4..5 -> matrix head, rows 6..7 -> weight 0.
    row = lax.broadcasted_iota(jnp.int32, (PACKED_ROWS, tile_n), 0)
    is_target = row < TARGET_SIZE

    def rows(t_vec, m_vec):
        return jnp.where(is_target,
                         jnp.broadcast_to(t_vec, (PACKED_ROWS, tile_n)),
                         jnp.broadcast_to(m_vec, (PACKED_ROWS, tile_n)))

    lam_rows = rows(lam_t, lam_m)
    zero_rows = rows(zero_t, zero_m)
    loglam_rows = rows(loglam_t, loglam_m)
    log1m_rows = jnp.where(is_target, log1m_pt, log1m_pm)

    # Rows 6..7 of `data` hold logits, not counts; their nll values are finite
    # garbage and receive weight 0 in the finalize reduce.
    nonzero_nll = (lam_rows - log1m_rows) - data * loglam_rows        # (8, TILE)
    nll = jnp.where(data == 0.0, zero_rows, nonzero_nll)              # (8, TILE)

    if needs_mask:
        is_last = i == pl.num_programs(0) - 1

        @pl.when(jnp.logical_not(is_last))
        def _accumulate_hot():
            acc_ref[...] += nll

        @pl.when(is_last)
        def _accumulate_masked():
            lane = lax.broadcasted_iota(jnp.int32, (PACKED_ROWS, tile_n), 1)
            valid = (i * tile_n + lane) < n_valid
            acc_ref[...] += jnp.where(valid, nll, 0.0)
    else:
        acc_ref[...] += nll

    @pl.when(i == pl.num_programs(0) - 1)
    def _finalize():
        # Per-row weights reproduce the two per-head means; rows 6..7 drop out.
        w = jnp.where(row < TARGET_SIZE, inv_target,
                      jnp.where(row < LABEL_SIZE, inv_matrix, 0.0))
        loss = jnp.sum(acc_ref[...] * w)
        out_ref[...] = jnp.full(out_ref.shape, loss, dtype=jnp.float32)


def zip_loss_pallas(y_true, y_pred, total_count, target_inflat_prob,
                    matrix_inflat_prob, *, tile_n=131072):
    y_true = jnp.reshape(y_true, (-1, LABEL_SIZE)).astype(jnp.float32)
    y_pred = jnp.reshape(y_pred, (-1, MATRIX_SIZE)).astype(jnp.float32)
    n = y_true.shape[0]

    # Lane tile: multiple of 128, clamped to the batch and to the VMEM-safe cap.
    tile_n = max(128, min(_round_up(min(tile_n, MAX_TILE_N), 128),
                          _round_up(n, 128)))
    num_tiles = pl.cdiv(n, tile_n)
    n_pad = num_tiles * tile_n

    # Lane-dense packed slab: rows 0:6 = y_true columns, rows 6:8 = y_pred columns.
    data = jnp.concatenate([y_true.T, y_pred.T], axis=0)              # (8, n)
    if n_pad != n:
        data = jnp.pad(data, ((0, 0), (0, n_pad - n)))                # (8, n_pad)

    # Scalar parameter prep (glue): sigmoid + the sample-independent log term.
    tc = jnp.float32(total_count)
    p_t = jax.nn.sigmoid(jnp.float32(target_inflat_prob))
    p_m = jax.nn.sigmoid(jnp.float32(matrix_inflat_prob))
    params = jnp.stack([tc, p_t, p_m,
                        jnp.log(1.0 - p_t + EPS),
                        jnp.log(1.0 - p_m + EPS)]).astype(jnp.float32)

    kernel = functools.partial(
        _zip_loss_kernel,
        tile_n=tile_n,
        n_valid=n,
        needs_mask=(n_pad != n),
        inv_target=float(1.0 / (n * TARGET_SIZE)),
        inv_matrix=float(1.0 / (n * MATRIX_SIZE)),
        eps=EPS,
    )

    # VMEM budget: 2 x (8, tile_n) f32 double-buffered input + (8, tile_n) f32
    # accumulator ~= 12 MiB at tile_n = 131072; 32 MiB limit is safe on v5e/v6e
    # (128 MiB physical) and v7x (64 MiB physical).
    vmem_limit = 32 * 1024 * 1024

    out = pl.pallas_call(
        kernel,
        out_shape=jax.ShapeDtypeStruct((8, 128), jnp.float32),
        grid_spec=pltpu.PrefetchScalarGridSpec(
            num_scalar_prefetch=0,
            grid=(num_tiles,),
            in_specs=[
                pl.BlockSpec(memory_space=pltpu.MemorySpace.SMEM),    # params (5,)
                pl.BlockSpec((PACKED_ROWS, tile_n), lambda i: (0, i)),  # data tile
            ],
            out_specs=pl.BlockSpec((8, 128), lambda i: (0, 0)),
            scratch_shapes=[
                pltpu.VMEM((PACKED_ROWS, tile_n), jnp.float32),       # fused NLL acc
            ],
        ),
        compiler_params=pltpu.CompilerParams(
            dimension_semantics=("arbitrary",),
            vmem_limit_bytes=vmem_limit),
        cost_estimate=pl.CostEstimate(
            flops=64 * n,
            transcendentals=8 * n,
            bytes_accessed=4 * PACKED_ROWS * n_pad + 4 * 8 * 128 + 4 * 5),
    )(params, data)

    return out[0, 0]


def zip_loss_ref(y_true, y_pred, total_count, target_inflat_prob, matrix_inflat_prob):
    """Pure-JAX reference mirroring the PyTorch module."""
    y_true = jnp.reshape(y_true, (-1, LABEL_SIZE)).astype(jnp.float32)
    y_pred = jnp.reshape(y_pred, (-1, MATRIX_SIZE)).astype(jnp.float32)
    yt_t, yt_m = y_true[:, :TARGET_SIZE], y_true[:, TARGET_SIZE:]
    yp_t, yp_m = y_pred[:, 0], y_pred[:, 1]
    t_lam = total_count * jnp.exp(yp_m + yp_t)
    m_lam = total_count * jnp.exp(yp_m)
    t_lam = jnp.broadcast_to(t_lam[:, None], yt_t.shape)
    m_lam = jnp.broadcast_to(m_lam[:, None], yt_m.shape)

    def zip_nll(lam, count, raw_p):
        p = jax.nn.sigmoid(raw_p)
        zero = -jnp.log(p + (1.0 - p) * jnp.exp(-lam) + EPS)
        nonzero = (lam - count * jnp.log(lam + EPS)) - jnp.log(1.0 - p + EPS)
        iz = (count == 0).astype(jnp.float32)
        return jnp.mean(iz * zero + (1.0 - iz) * nonzero)

    return zip_nll(t_lam, yt_t, target_inflat_prob) + zip_nll(m_lam, yt_m, matrix_inflat_prob)


if __name__ == "__main__":
    key = jax.random.PRNGKey(0)
    k1, k2, k3, k4 = jax.random.split(key, 4)

    # Deterministic parameter init, matching the module's __init__.
    total_count = 1.0
    target_inflat_prob = 0.0
    matrix_inflat_prob = 0.0

    def check(n, ka, kb):
        y_true = jax.random.poisson(ka, 0.7, shape=(n, LABEL_SIZE)).astype(jnp.float32)
        y_pred = (0.1 * jax.random.normal(kb, (n, 2))).astype(jnp.float32)
        loss = zip_loss_pallas(y_true, y_pred, total_count,
                               target_inflat_prob, matrix_inflat_prob)
        loss = jax.block_until_ready(loss)
        ref = zip_loss_ref(y_true, y_pred, total_count,
                           target_inflat_prob, matrix_inflat_prob)
        assert jnp.isfinite(loss), "loss is not finite"
        assert abs(float(loss) - float(ref)) < 1e-4 * max(1.0, abs(float(ref))), \
            f"mismatch (n={n}): pallas={float(loss)} ref={float(ref)}"

    check(256, k1, k2)   # lane-exact batch (no padding)
    check(300, k3, k4)   # padded batch -> exercises the gated last-tile mask

    print("KERNEL_OK")
</pallas_src>

<mosaic_0001>
module attributes {stable_mosaic.version = 11 : i64} {
  func.func @_zip_loss_kernel(%arg0: i32, %arg1: memref<5xf32, #tpu.memory_space<smem>>, %arg2: memref<8x256xf32, #tpu.memory_space<vmem>>, %arg3: memref<8x128xf32, #tpu.memory_space<vmem>>, %arg4: memref<8x256xf32, #tpu.memory_space<vmem>>) attributes {dimension_semantics = [#tpu.dimension_semantics<arbitrary>], iteration_bounds = array<i64: 1>, scalar_prefetch = 0 : i64, scratch_operands = 1 : i64, tpu.core_type = #tpu.core_type<tc>, window_params = [{transform_indices = @transform_0, window_bounds = array<i64: 5>}, {transform_indices = @transform_1, window_bounds = array<i64: 8, 256>}, {pipeline_mode = #tpu.pipeline_mode<synchronous>, transform_indices = @transform_2, window_bounds = array<i64: 8, 128>}]} {
    %c0_i32 = arith.constant 0 : i32
    %0 = arith.cmpi eq, %arg0, %c0_i32 : i32
    %1 = arith.extui %0 : i1 to i32
    %c0_i32_0 = arith.constant 0 : i32
    %2 = arith.cmpi ne, %1, %c0_i32_0 : i32
    scf.if %2 {
      %cst_19 = arith.constant 0.000000e+00 : f32
      %83 = vector.broadcast %cst_19 : f32 to vector<8x256xf32>
      %c0_20 = arith.constant 0 : index
      %c0_21 = arith.constant 0 : index
      %84 = vector.load %arg4[%c0_20, %c0_21] : memref<8x256xf32, #tpu.memory_space<vmem>>, vector<8x256xf32>
      tpu.vector_store %arg4[%c0_20, %c0_21], %83 {strides = array<i32>} : memref<8x256xf32, #tpu.memory_space<vmem>>, vector<8x256xf32>,
    } else {
    }
    %c0 = arith.constant 0 : index
    %3 = memref.load %arg1[%c0] : memref<5xf32, #tpu.memory_space<smem>>
    %c1 = arith.constant 1 : index
    %4 = memref.load %arg1[%c1] : memref<5xf32, #tpu.memory_space<smem>>
    %c2 = arith.constant 2 : index
    %5 = memref.load %arg1[%c2] : memref<5xf32, #tpu.memory_space<smem>>
    %c3 = arith.constant 3 : index
    %6 = memref.load %arg1[%c3] : memref<5xf32, #tpu.memory_space<smem>>
    %c4 = arith.constant 4 : index
    %7 = memref.load %arg1[%c4] : memref<5xf32, #tpu.memory_space<smem>>
    %c0_1 = arith.constant 0 : index
    %c0_2 = arith.constant 0 : index
    %8 = vector.load %arg2[%c0_1, %c0_2] : memref<8x256xf32, #tpu.memory_space<vmem>>, vector<8x256xf32>
    %9 = vector.extract_strided_slice %8 {offsets = [6, 0], sizes = [1, 256], strides = [1, 1]} : vector<8x256xf32> to vector<1x256xf32>
    %10 = vector.extract_strided_slice %8 {offsets = [7, 0], sizes = [1, 256], strides = [1, 1]} : vector<8x256xf32> to vector<1x256xf32>
    %11 = arith.addf %10, %9 : vector<1x256xf32>
    %12 = math.exp %11 : vector<1x256xf32>
    %13 = vector.broadcast %3 : f32 to vector<1x256xf32>
    %14 = arith.mulf %13, %12 : vector<1x256xf32>
    %15 = math.exp %10 : vector<1x256xf32>
    %16 = vector.broadcast %3 : f32 to vector<1x256xf32>
    %17 = arith.mulf %16, %15 : vector<1x256xf32>
    %cst = arith.constant 1.000000e+00 : f32
    %18 = arith.subf %cst, %4 : f32
    %cst_3 = arith.constant 0.000000e+00 : f32
    %19 = vector.broadcast %cst_3 : f32 to vector<1x256xf32>
    %20 = arith.subf %19, %14 : vector<1x256xf32>
    %21 = math.exp %20 : vector<1x256xf32>
    %22 = vector.broadcast %18 : f32 to vector<1x256xf32>
    %23 = arith.mulf %22, %21 : vector<1x256xf32>
    %24 = vector.broadcast %4 : f32 to vector<1x256xf32>
    %25 = arith.addf %24, %23 : vector<1x256xf32>
    %cst_4 = arith.constant 9.99999993E-9 : f32
    %26 = vector.broadcast %cst_4 : f32 to vector<1x256xf32>
    %27 = arith.addf %25, %26 : vector<1x256xf32>
    %28 = math.log %27 : vector<1x256xf32>
    %cst_5 = arith.constant 0.000000e+00 : f32
    %29 = vector.broadcast %cst_5 : f32 to vector<1x256xf32>
    %30 = arith.subf %29, %28 : vector<1x256xf32>
    %cst_6 = arith.constant 1.000000e+00 : f32
    %31 = arith.subf %cst_6, %5 : f32
    %cst_7 = arith.constant 0.000000e+00 : f32
    %32 = vector.broadcast %cst_7 : f32 to vector<1x256xf32>
    %33 = arith.subf %32, %17 : vector<1x256xf32>
    %34 = math.exp %33 : vector<1x256xf32>
    %35 = vector.broadcast %31 : f32 to vector<1x256xf32>
    %36 = arith.mulf %35, %34 : vector<1x256xf32>
    %37 = vector.broadcast %5 : f32 to vector<1x256xf32>
    %38 = arith.addf %37, %36 : vector<1x256xf32>
    %cst_8 = arith.constant 9.99999993E-9 : f32
    %39 = vector.broadcast %cst_8 : f32 to vector<1x256xf32>
    %40 = arith.addf %38, %39 : vector<1x256xf32>
    %41 = math.log %40 : vector<1x256xf32>
    %cst_9 = arith.constant 0.000000e+00 : f32
    %42 = vector.broadcast %cst_9 : f32 to vector<1x256xf32>
    %43 = arith.subf %42, %41 : vector<1x256xf32>
    %cst_10 = arith.constant 9.99999993E-9 : f32
    %44 = vector.broadcast %cst_10 : f32 to vector<1x256xf32>
    %45 = arith.addf %14, %44 : vector<1x256xf32>
    %46 = math.log %45 : vector<1x256xf32>
    %cst_11 = arith.constant 9.99999993E-9 : f32
    %47 = vector.broadcast %cst_11 : f32 to vector<1x256xf32>
    %48 = arith.addf %17, %47 : vector<1x256xf32>
    %49 = math.log %48 : vector<1x256xf32>
    %50 = tpu.iota {dimensions = array<i32: 0>} : vector<8x256xi32>
    %c4_i32 = arith.constant 4 : i32
    %51 = vector.broadcast %c4_i32 : i32 to vector<8x256xi32>
    %52 = arith.cmpi slt, %50, %51 : vector<8x256xi32>
    %53 = vector.shape_cast %14 : vector<1x256xf32> to vector<1x256xf32>
    %54 = vector.broadcast %53 : vector<1x256xf32> to vector<8x256xf32>
    %55 = vector.shape_cast %17 : vector<1x256xf32> to vector<1x256xf32>
    %56 = vector.broadcast %55 : vector<1x256xf32> to vector<8x256xf32>
    %57 = arith.select %52, %54, %56 : vector<8x256xi1>, vector<8x256xf32>
    %58 = vector.shape_cast %30 : vector<1x256xf32> to vector<1x256xf32>
    %59 = vector.broadcast %58 : vector<1x256xf32> to vector<8x256xf32>
    %60 = vector.shape_cast %43 : vector<1x256xf32> to vector<1x256xf32>
    %61 = vector.broadcast %60 : vector<1x256xf32> to vector<8x256xf32>
    %62 = arith.select %52, %59, %61 : vector<8x256xi1>, vector<8x256xf32>
    %63 = vector.shape_cast %46 : vector<1x256xf32> to vector<1x256xf32>
    %64 = vector.broadcast %63 : vector<1x256xf32> to vector<8x256xf32>
    %65 = vector.shape_cast %49 : vector<1x256xf32> to vector<1x256xf32>
    %66 = vector.broadcast %65 : vector<1x256xf32> to vector<8x256xf32>
    %67 = arith.select %52, %64, %66 : vector<8x256xi1>, vector<8x256xf32>
    %68 = vector.broadcast %6 : f32 to vector<8x256xf32>
    %69 = vector.broadcast %7 : f32 to vector<8x256xf32>
    %70 = arith.select %52, %68, %69 : vector<8x256xi1>, vector<8x256xf32>
    %71 = arith.subf %57, %70 : vector<8x256xf32>
    %72 = arith.mulf %8, %67 : vector<8x256xf32>
    %73 = arith.subf %71, %72 : vector<8x256xf32>
    %cst_12 = arith.constant 0.000000e+00 : f32
    %74 = vector.broadcast %cst_12 : f32 to vector<8x256xf32>
    %75 = arith.cmpf oeq, %8, %74 : vector<8x256xf32>
    %76 = arith.select %75, %62, %73 : vector<8x256xi1>, vector<8x256xf32>
    %c0_13 = arith.constant 0 : index
    %c0_14 = arith.constant 0 : index
    %77 = vector.load %arg4[%c0_13, %c0_14] : memref<8x256xf32, #tpu.memory_space<vmem>>, vector<8x256xf32>
    %78 = arith.addf %77, %76 : vector<8x256xf32>
    %c0_15 = arith.constant 0 : index
    %c0_16 = arith.constant 0 : index
    %79 = vector.load %arg4[%c0_15, %c0_16] : memref<8x256xf32, #tpu.memory_space<vmem>>, vector<8x256xf32>
    tpu.vector_store %arg4[%c0_15, %c0_16], %78 {strides = array<i32>} : memref<8x256xf32, #tpu.memory_space<vmem>>, vector<8x256xf32>,
    %c0_i32_17 = arith.constant 0 : i32
    %80 = arith.cmpi eq, %arg0, %c0_i32_17 : i32
    %81 = arith.extui %80 : i1 to i32
    %c0_i32_18 = arith.constant 0 : i32
    %82 = arith.cmpi ne, %81, %c0_i32_18 : i32
    scf.if %82 {
      %c4_i32_19 = arith.constant 4 : i32
      %83 = vector.broadcast %c4_i32_19 : i32 to vector<8x256xi32>
      %84 = arith.cmpi slt, %50, %83 : vector<8x256xi32>
      %c6_i32 = arith.constant 6 : i32
      %85 = vector.broadcast %c6_i32 : i32 to vector<8x256xi32>
      %86 = arith.cmpi slt, %50, %85 : vector<8x256xi32>
      %cst_20 = arith.constant 0.001953125 : f32
      %cst_21 = arith.constant 0.000000e+00 : f32
      %87 = vector.broadcast %cst_20 : f32 to vector<8x256xf32>
      %88 = vector.broadcast %cst_21 : f32 to vector<8x256xf32>
      %89 = arith.select %86, %87, %88 : vector<8x256xi1>, vector<8x256xf32>
      %cst_22 = arith.constant 9.765625E-4 : f32
      %90 = vector.broadcast %cst_22 : f32 to vector<8x256xf32>
      %91 = arith.select %84, %90, %89 : vector<8x256xi1>, vector<8x256xf32>
      %c0_23 = arith.constant 0 : index
      %c0_24 = arith.constant 0 : index
      %92 = vector.load %arg4[%c0_23, %c0_24] : memref<8x256xf32, #tpu.memory_space<vmem>>, vector<8x256xf32>
      %93 = arith.mulf %92, %91 : vector<8x256xf32>
      %94 = vector.shape_cast %93 : vector<8x256xf32> to vector<1x8x256xf32>
      %cst_25 = arith.constant dense<0.000000e+00> : vector<1xf32>
      %95 = vector.multi_reduction <add>, %94, %cst_25 [1, 2] : vector<1x8x256xf32> to vector<1xf32>
      %96 = vector.shape_cast %95 : vector<1xf32> to vector<1x1x1xf32>
      %97 = vector.extract %96[0, 0, 0] : f32 from vector<1x1x1xf32>
      %98 = vector.broadcast %97 : f32 to vector<8x128xf32>
      %c0_26 = arith.constant 0 : index
      %c0_27 = arith.constant 0 : index
      %99 = vector.load %arg3[%c0_26, %c0_27] : memref<8x128xf32, #tpu.memory_space<vmem>>, vector<8x128xf32>
      tpu.vector_store %arg3[%c0_26, %c0_27], %98 {strides = array<i32>} : memref<8x128xf32, #tpu.memory_space<vmem>>, vector<8x128xf32>,
    } else {
    }
    return
  }
  func.func @transform_0(%arg0: i32) -> i32 {
    %c0_i32 = arith.constant 0 : i32
    %c0_i32_0 = arith.constant 0 : i32
    return %c0_i32 : i32
  }
  func.func @transform_1(%arg0: i32) -> (i32, i32) {
    %c0_i32 = arith.constant 0 : i32
    %c0_i32_0 = arith.constant 0 : i32
    return %c0_i32, %arg0 : i32, i32
  }
  func.func @transform_2(%arg0: i32) -> (i32, i32) {
    %c0_i32 = arith.constant 0 : i32
    %c0_i32_0 = arith.constant 0 : i32
    %c0_i32_1 = arith.constant 0 : i32
    return %c0_i32, %c0_i32_0 : i32, i32
  }
}

</mosaic_0001>

<llo_original>
// kernel: tpu_custom_call.1
$region0: #{tpu_custom_call.1}
  #allocation0 [shape = 'u32[]', space=smem, size = 0x4, offset = 0x4, fixed_abs, tag = 'smem constant byte address 0x4 - core index']
  #allocation1 [shape = 'u32[144,128]{1,0:T(1,128)}', space=vmem, size = 0x12000, scoped, tag = 'internal scratch']
  #allocation2 [shape = 'f32[8,256]{1,0:T(8,128)}', space=vmem, size = 0x2000, scoped, tag = 'scratch operand']
  %s0 = inlined_call_operand.hbm [shape: f32[5], index: 0, kind: input, shape index: {}]
  %s1 = inlined_call_operand.hbm [shape: f32[8,256], index: 1, kind: input, shape index: {}]
  %s2 = inlined_call_operand.hbm [shape: f32[8,128], index: 2, kind: output, shape index: {}]
  %s3 = sld [smem:[#allocation0]]
  $region34: #{tpu_custom_call.1} parent=0
    _
  %s5 = ssub.s32 1, %s3
  %s6 = scalar_select 0, %s5, %s3
  $region1: #{tpu_custom_call.1} parent=0
    #allocation3 [shape = 'u8[512]{0}', space=smem, size = 0x200, scoped, tag = 'input window, operand 0, single buffered']
    #allocation4 [shape = 's32[1]{0}', space=sflag, size = 0x4, scoped, tag = 'scoped memory for tpu_custom_call.1']
    #allocation5 [shape = 's32[1]{0}', space=sflag, size = 0x4, scoped, tag = 'scoped memory for tpu_custom_call.1']
    #allocation6 [shape = 's32[1]{0}', space=sflag, size = 0x4, scoped, tag = 'scoped memory for tpu_custom_call.1']
    #allocation7 [shape = 'u8[8192]{0}', space=vmem, size = 0x2000, scoped, tag = 'input window, operand 1, single buffered']
    #allocation8 [shape = 'u8[4096]{0}', space=vmem, size = 0x1000, scoped, tag = 'output window, operand 0, single buffered']
    %7 = vsyncpa [#allocation6], 0
    %8 = vsyncpa [#allocation4], 0
    %9 = vsyncpa [#allocation5], 0
    // Predicated region
    $region2: #{tpu_custom_call.1} parent=1 // pred_check
      _
    $region3: #{tpu_custom_call.1} parent=1 // pred_check_branch
      %11 = sbr.rel (0) target = $region5
    $region4: #{tpu_custom_call.1} parent=1 // pred_region
      %s13 = ssub.s32 16, 16
      %14 = vsyncadd [#allocation6], %s13
      %17 = dma.hbm_to_smem %s0, 16, [#allocation3], [#allocation6]
    $region5: #{tpu_custom_call.1} parent=1 // pred_fallthru
      _
    // Predicated region
    $region6: #{tpu_custom_call.1} parent=1 // pred_check
      _
    $region7: #{tpu_custom_call.1} parent=1 // pred_check_branch
      %19 = sbr.rel (0) target = $region9
    $region8: #{tpu_custom_call.1} parent=1 // pred_region
      %s21 = ssub.s32 256, 256
      %22 = vsyncadd [#allocation4], %s21
      %s24 = sshll.u32 [#allocation7], 4
      %s25 = int_to_ptr.vmem [resolvable:$true] %s24
      %27 = dma.hbm_to_vmem [thread:$0]  %s1, 256, %s25, [#allocation4]
    $region9: #{tpu_custom_call.1} parent=1 // pred_fallthru
      _
    // Predicated region
    $region10: #{tpu_custom_call.1} parent=1 // pred_check
      _
    $region11: #{tpu_custom_call.1} parent=1 // pred_check_branch
      %29 = sbr.rel (0) target = $region13
    $region12: #{tpu_custom_call.1} parent=1 // pred_region
      %30 = dma.done [#allocation6], 16
    $region13: #{tpu_custom_call.1} parent=1 // pred_fallthru
      _
    // Predicated region
    $region14: #{tpu_custom_call.1} parent=1 // pred_check
      _
    $region15: #{tpu_custom_call.1} parent=1 // pred_check_branch
      %32 = sbr.rel (0) target = $region17
    $region16: #{tpu_custom_call.1} parent=1 // pred_region
      %33 = dma.done [#allocation4], 256
    $region17: #{tpu_custom_call.1} parent=1 // pred_fallthru
      _
    %34 = sfence
    %p35 = scmp.eq.s32.totalorder 0, 0
    // Predicated region
    $region18: #{tpu_custom_call.1} parent=1 // pred_check
      %p36 = pneg %p35
    $region19: #{tpu_custom_call.1} parent=1 // pred_check_branch
      %38 = sbr.rel (%p36) target = $region21
    $region20: #{tpu_custom_call.1} parent=1 // pred_region
      %39 = vst [vmem:[#allocation2] sm:$0xff] 0.0
      %40 = vst [vmem:[#allocation2 + $0x8] sm:$0xff] 0.0
    $region21: #{tpu_custom_call.1} parent=1 // pred_fallthru
      _
    %s41 = sld [smem:[#allocation3]]
    %s42 = sld [smem:[#allocation3 + $0x1]]
    %s43 = sld [smem:[#allocation3 + $0x2]]
    %s44 = sld [smem:[#allocation3 + $0x3]]
    %s45 = sld [smem:[#allocation3 + $0x4]]
    %v46 = vld [vmem:[#allocation7] sm:$0xff]
    %v47 = vld [vmem:[#allocation7 + $0x8] sm:$0xff]
    %v50 = vrot.slane %v46, 7
    %v51 = vrot.slane %v47, 7
    %v54 = vadd.f32 %v46, %v50
    %v55 = vadd.f32 %v47, %v51
    %v56 = vmul.f32 %v54, 1.442695
    %v57 = vpow.pop %v56
    %v58 = vmul.f32 %v55, 1.442695
    %v59 = vpow.pop %v58
    %v60 = vstv %s41
    %v61 = vmul.f32 %v60, %v57
    %v62 = vmul.f32 %v60, %v59
    %v63 = vmul.f32 %v46, 1.442695
    %v64 = vpow.pop %v63
    %v65 = vmul.f32 %v47, 1.442695
    %v66 = vpow.pop %v65
    %v67 = vmul.f32 %v60, %v64
    %v68 = vmul.f32 %v60, %v66
    %s69 = ssub.f32 1.0, %s42
    %v70 = vsub.f32 0.0, %v61
    %v71 = vsub.f32 0.0, %v62
    %v72 = vmul.f32 %v70, 1.442695
    %v73 = vpow.pop %v72
    %v74 = vmul.f32 %v71, 1.442695
    %v75 = vpow.pop %v74
    %v76 = vstv %s69
    %v77 = vmul.f32 %v76, %v73
    %v78 = vmul.f32 %v76, %v75
    %v79 = vstv %s42
    %v80 = vadd.f32 %v79, %v77
    %v81 = vadd.f32 %v79, %v78
    %v82 = vadd.f32 %v80, 1e-08
    %v83 = vadd.f32 %v81, 1e-08
    %v84 = vlog2.pop %v82
    %v85 = vmul.f32 %v84, 0.6931472
    %v86 = vlog2.pop %v83
    %v87 = vmul.f32 %v86, 0.6931472
    %v88 = vsub.f32 0.0, %v85
    %v89 = vsub.f32 0.0, %v87
    %s90 = ssub.f32 1.0, %s43
    %v91 = vsub.f32 0.0, %v67
    %v92 = vsub.f32 0.0, %v68
    %v93 = vmul.f32 %v91, 1.442695
    %v94 = vpow.pop %v93
    %v95 = vmul.f32 %v92, 1.442695
    %v96 = vpow.pop %v95
    %v97 = vstv %s90
    %v98 = vmul.f32 %v97, %v94
    %v99 = vmul.f32 %v97, %v96
    %v100 = vstv %s43
    %v101 = vadd.f32 %v100, %v98
    %v102 = vadd.f32 %v100, %v99
    %v103 = vadd.f32 %v101, 1e-08
    %v104 = vadd.f32 %v102, 1e-08
    %v105 = vlog2.pop %v103
    %v106 = vmul.f32 %v105, 0.6931472
    %v107 = vlog2.pop %v104
    %v108 = vmul.f32 %v107, 0.6931472
    %v109 = vsub.f32 0.0, %v106
    %v110 = vsub.f32 0.0, %v108
    %v111 = vadd.f32 %v61, 1e-08
    %v112 = vadd.f32 %v62, 1e-08
    %v113 = vlog2.pop %v111
    %v114 = vmul.f32 %v113, 0.6931472
    %v115 = vlog2.pop %v112
    %v116 = vmul.f32 %v115, 0.6931472
    %v117 = vadd.f32 %v67, 1e-08
    %v118 = vadd.f32 %v68, 1e-08
    %v119 = vlog2.pop %v117
    %v120 = vmul.f32 %v119, 0.6931472
    %v121 = vlog2.pop %v118
    %v122 = vmul.f32 %v121, 0.6931472
    %v123 = vlaneseq
    %v124 = vshrl.u32 %v123, 7
    %vm125 = vcmp.lt.s32.totalorder %v124, 4
    %v126 = vlaneseq
    %v127 = vshrl.u32 %v126, 7
    %v128 = vsub.s32 7, %v127
    %v129 = vrot.slane %v61, %v128
    %v130 = vlaneseq
    %v131 = vshrl.u32 %v130, 7
    %v132 = vsub.s32 7, %v131
    %v133 = vrot.slane %v62, %v132
    %v134 = vlaneseq
    %v135 = vshrl.u32 %v134, 7
    %v136 = vsub.s32 7, %v135
    %v137 = vrot.slane %v67, %v136
    %v138 = vlaneseq
    %v139 = vshrl.u32 %v138, 7
    %v140 = vsub.s32 7, %v139
    %v141 = vrot.slane %v68, %v140
    %v142 = vsel %vm125, %v129, %v137
    %v143 = vsel %vm125, %v133, %v141
    %v144 = vlaneseq
    %v145 = vshrl.u32 %v144, 7
    %v146 = vsub.s32 7, %v145
    %v147 = vrot.slane %v88, %v146
    %v148 = vlaneseq
    %v149 = vshrl.u32 %v148, 7
    %v150 = vsub.s32 7, %v149
    %v151 = vrot.slane %v89, %v150
    %v152 = vlaneseq
    %v153 = vshrl.u32 %v152, 7
    %v154 = vsub.s32 7, %v153
    %v155 = vrot.slane %v109, %v154
    %v156 = vlaneseq
    %v157 = vshrl.u32 %v156, 7
    %v158 = vsub.s32 7, %v157
    %v159 = vrot.slane %v110, %v158
    %v160 = vsel %vm125, %v147, %v155
    %v161 = vsel %vm125, %v151, %v159
    %v162 = vlaneseq
    %v163 = vshrl.u32 %v162, 7
    %v164 = vsub.s32 7, %v163
    %v165 = vrot.slane %v114, %v164
    %v166 = vlaneseq
    %v167 = vshrl.u32 %v166, 7
    %v168 = vsub.s32 7, %v167
    %v169 = vrot.slane %v116, %v168
    %v170 = vlaneseq
    %v171 = vshrl.u32 %v170, 7
    %v172 = vsub.s32 7, %v171
    %v173 = vrot.slane %v120, %v172
    %v174 = vlaneseq
    %v175 = vshrl.u32 %v174, 7
    %v176 = vsub.s32 7, %v175
    %v177 = vrot.slane %v122, %v176
    %v178 = vsel %vm125, %v165, %v173
    %v179 = vsel %vm125, %v169, %v177
    %v180 = vstv %s44
    %v181 = vstv %s45
    %v182 = vsel %vm125, %v180, %v181
    %v183 = vsub.f32 %v142, %v182
    %v184 = vsub.f32 %v143, %v182
    %v185 = vmul.f32 %v46, %v178
    %v186 = vmul.f32 %v47, %v179
    %v187 = vsub.f32 %v183, %v185
    %v188 = vsub.f32 %v184, %v186
    %vm189 = vcmp.eq.f32.partialorder %v46, 0.0
    %vm190 = vcmp.eq.f32.partialorder %v47, 0.0
    %v191 = vsel %vm189, %v160, %v187
    %v192 = vsel %vm190, %v161, %v188
    %v193 = vld [vmem:[#allocation2] sm:$0xff]
    %v194 = vld [vmem:[#allocation2 + $0x8] sm:$0xff]
    %v195 = vadd.f32 %v193, %v191
    %v196 = vadd.f32 %v194, %v192
    %197 = vst [vmem:[#allocation2] sm:$0xff] %v195
    %198 = vst [vmem:[#allocation2 + $0x8] sm:$0xff] %v196
    // Predicated region
    $region22: #{tpu_custom_call.1} parent=1 // pred_check
      %p199 = pneg %p35
    $region23: #{tpu_custom_call.1} parent=1 // pred_check_branch
      %201 = sbr.rel (%p199) target = $region25
    $region24: #{tpu_custom_call.1} parent=1 // pred_region
      %vm202 = vcmp.lt.s32.totalorder %v124, 6
      %v203 = vsel %vm202, 0.001953125, 0.0
      %v204 = vsel %vm125, 0.0009765625, %v203
      %v205 = vld [vmem:[#allocation2] sm:$0xff]
      %v206 = vld [vmem:[#allocation2 + $0x8] sm:$0xff]
      %v207 = vmul.f32 %v205, %v204
      %v208 = vmul.f32 %v206, %v204
      %v209 = vadd.f32 %v207, %v208
      %210 = vadd.xlane.f32.xlu0 %v209
      %v211 = vpop.xlane.xlu0 %210
      %v212 = vrot.slane %v211, 4
      %v213 = vadd.f32 %v211, %v212
      %v214 = vrot.slane %v213, 2
      %v215 = vadd.f32 %v213, %v214
      %v216 = vrot.slane %v215, 1
      %v217 = vadd.f32 %v215, %v216
      %s218 = vtos %v217
      %v219 = vstv %s218
      %220 = vst [vmem:[#allocation8] sm:$0xff] %v219
    $region25: #{tpu_custom_call.1} parent=1 // pred_fallthru
      _
    // Predicated region
    $region26: #{tpu_custom_call.1} parent=1 // pred_check
      _
    $region27: #{tpu_custom_call.1} parent=1 // pred_check_branch
      %222 = sbr.rel (0) target = $region29
    $region28: #{tpu_custom_call.1} parent=1 // pred_region
      %s224 = ssub.s32 128, 128
      %225 = vsyncadd [#allocation5], %s224
      %s227 = sshll.u32 [#allocation8], 4
      %s228 = int_to_ptr.vmem [resolvable:$true] %s227
      %230 = dma.vmem_to_hbm [thread:$0]  %s228, 128, %s2, [#allocation5]
    $region29: #{tpu_custom_call.1} parent=1 // pred_fallthru
      _
    // Predicated region
    $region30: #{tpu_custom_call.1} parent=1 // pred_check
      _
    $region31: #{tpu_custom_call.1} parent=1 // pred_check_branch
      %232 = sbr.rel (0) target = $region33
    $region32: #{tpu_custom_call.1} parent=1 // pred_region
      %233 = dma.done [#allocation5], 128
    $region33: #{tpu_custom_call.1} parent=1 // pred_fallthru
      _
    %234 = vsyncpa [#allocation4], 1
    %235 = vsyncpa [#allocation5], 1
    %236 = vsyncpa [#allocation6], 1

</llo_original>
